<compile_context>
chip_gen: v5e
topology: v5e:2x2
jax: 0.10.0
libtpu: 0.0.40
codegen_flags: <defaults>
</compile_context>

<pallas_src>
import functools

import jax
import jax.numpy as jnp
from jax.experimental import pallas as pl
from jax.experimental.pallas import tpu as pltpu

_LANE = 128
_SUBLANE = 8


def _round_up(x, m):
    return ((x + m - 1) // m) * m


def linear_logsoftmax_kernel(x_ref, w_ref, b_ref, o_ref, *, n_valid):
    # x_ref: (tb, Din)   w_ref: (Din, Dpad)  -- pre-transposed, lane-dense
    # b_ref: (1, Dpad)   o_ref: (tb, Dpad)
    x = x_ref[...]
    w = w_ref[...]
    b = b_ref[...]

    # Linear: x @ W_t + b (MXU, f32 accumulation, no in-kernel transpose).
    logits = jnp.dot(x, w, preferred_element_type=jnp.float32) + b

    dpad = logits.shape[-1]
    if n_valid < dpad:
        # Mask lane-padding columns so they do not perturb the log-sum-exp
        # (exp(-1e30 - m) underflows to exactly 0).
        col = jax.lax.broadcasted_iota(jnp.int32, logits.shape, dimension=1)
        logits = jnp.where(col < n_valid, logits, jnp.float32(-1e30))

    # Numerically stable log_softmax over the feature axis (dim=1).
    m = jnp.max(logits, axis=-1, keepdims=True)
    shifted = logits - m
    lse = jnp.log(jnp.sum(jnp.exp(shifted), axis=-1, keepdims=True))
    o_ref[...] = (shifted - lse).astype(o_ref.dtype)


def prepare_params(weight, bias):
    """One-time layout plumbing (hoisted out of the per-call path).

    weight: [Dout, Din] (PyTorch nn.Linear layout), bias: [Dout]
    Returns lane-dense w_t: [Din, Dpad] and b2d: [1, Dpad].
    """
    Dout, Din = weight.shape
    Dpad = _round_up(Dout, _LANE)
    w_t = jnp.zeros((Din, Dpad), dtype=weight.dtype).at[:, :Dout].set(weight.T)
    b2d = jnp.zeros((1, Dpad), dtype=bias.dtype).at[:, :Dout].set(
        bias.reshape(1, Dout))
    return w_t, b2d


@functools.partial(
    jax.jit, static_argnames=("n_valid", "batch_tile", "single_buffer_consts"))
def model_forward(x, w_t, b2d, *, n_valid, batch_tile=512,
                  single_buffer_consts=True):
    """x: [B, Din] f32, w_t: [Din, Dpad], b2d: [1, Dpad] (from prepare_params)."""
    B, Din = x.shape
    Din2, Dpad = w_t.shape
    assert Din == Din2
    kernel = functools.partial(linear_logsoftmax_kernel, n_valid=n_valid)

    gridless_threshold = max(_SUBLANE, batch_tile // 2)
    if B <= gridless_threshold:
        # Small problem: no grid, whole arrays as single VMEM blocks
        # (no pipeline / double-buffer machinery).
        out = pl.pallas_call(
            kernel,
            out_shape=jax.ShapeDtypeStruct((B, Dpad), jnp.float32),
            in_specs=[
                pl.BlockSpec(memory_space=pltpu.MemorySpace.VMEM),
                pl.BlockSpec(memory_space=pltpu.MemorySpace.VMEM),
                pl.BlockSpec(memory_space=pltpu.MemorySpace.VMEM),
            ],
            out_specs=pl.BlockSpec(memory_space=pltpu.MemorySpace.VMEM),
        )(x, w_t, b2d)
    else:
        # Tiled batch axis ("parallel" -> megacore sharding on v7x); Dout kept
        # whole per block since it is the log-softmax reduction axis.
        # >= 2 blocks for medium batches so both v7x TensorCores get work.
        tb = min(batch_tile, _round_up(pl.cdiv(B, 2), _SUBLANE))

        # Per-step VMEM footprint: x & out double-buffered, constant blocks
        # single- or double-buffered depending on single_buffer_consts.
        const_mult = 1 if single_buffer_consts else 2

        def footprint(t):
            return 4 * (2 * t * Din
                        + const_mult * (Din * Dpad + Dpad)
                        + 2 * t * Dpad)

        budget = 40 * 1024 * 1024  # safe across v5e/v6e/v7x scoped VMEM
        while tb > _SUBLANE and footprint(tb) > budget:
            tb = max(_SUBLANE, _round_up(tb // 2, _SUBLANE))

        vmem_limit = int(min(64 * 1024 * 1024,
                             max(32 * 1024 * 1024, 2 * footprint(tb))))

        def const_spec(shape):
            # Constant index_map -> the block never changes; single-buffer it.
            if single_buffer_consts:
                return pl.BlockSpec(shape, lambda i: (0, 0),
                                    pipeline_mode=pl.Buffered(1))
            return pl.BlockSpec(shape, lambda i: (0, 0))

        out = pl.pallas_call(
            kernel,
            out_shape=jax.ShapeDtypeStruct((B, Dpad), jnp.float32),
            # Ragged last block: log_softmax is row-wise, junk rows are never
            # written back (Pallas masks out-of-range output stores).
            grid=(pl.cdiv(B, tb),),
            in_specs=[
                pl.BlockSpec((tb, Din), lambda i: (i, 0)),
                const_spec((Din, Dpad)),
                const_spec((1, Dpad)),
            ],
            out_specs=pl.BlockSpec((tb, Dpad), lambda i: (i, 0)),
            compiler_params=pltpu.CompilerParams(
                dimension_semantics=("parallel",),
                vmem_limit_bytes=vmem_limit),
        )(x, w_t, b2d)

    # Drop the lane padding (fuses into the jitted epilogue).
    return out[:, :n_valid]


if __name__ == "__main__":
    # Small shapes implied by the module: batch=8, n_inputs=32, n_outputs=16
    B, n_inputs, n_outputs = 8, 32, 16

    key = jax.random.PRNGKey(0)
    kx, kw, kb, kx2 = jax.random.split(key, 4)
    # Deterministic stand-ins for the numpy param_inits.
    weight = jax.random.normal(kw, (n_outputs, n_inputs), dtype=jnp.float32) * 0.1
    bias = jax.random.normal(kb, (n_outputs,), dtype=jnp.float32) * 0.1
    x = jax.random.normal(kx, (B, n_inputs), dtype=jnp.float32)

    # One-time weight layout prep, hoisted out of the forward path.
    w_t, b2d = jax.block_until_ready(prepare_params(weight, bias))

    # Small-batch (grid-less) path.
    out = jax.block_until_ready(model_forward(x, w_t, b2d, n_valid=n_outputs))
    ref = jax.nn.log_softmax(x @ weight.T + bias, axis=1)
    assert out.shape == ref.shape, "shape mismatch vs reference"
    assert jnp.allclose(out, ref, atol=1e-5, rtol=1e-5), "mismatch vs reference"

    # Large-batch (tiled, parallel, ragged last block) path.
    x_big = jax.random.normal(kx2, (700, n_inputs), dtype=jnp.float32)
    try:
        out_big = model_forward(x_big, w_t, b2d, n_valid=n_outputs,
                                batch_tile=512)
    except Exception:
        # Fallback if this JAX build rejects single-buffered constant blocks.
        out_big = model_forward(x_big, w_t, b2d, n_valid=n_outputs,
                                batch_tile=512, single_buffer_consts=False)
    out_big = jax.block_until_ready(out_big)
    ref_big = jax.nn.log_softmax(x_big @ weight.T + bias, axis=1)
    assert out_big.shape == ref_big.shape, "shape mismatch vs reference (big)"
    assert jnp.allclose(out_big, ref_big, atol=1e-5, rtol=1e-5), \
        "mismatch vs reference (big)"

    print("KERNEL_OK")
</pallas_src>

<mosaic_0001>
module attributes {stable_mosaic.version = 11 : i64} {
  func.func @linear_logsoftmax_kernel(%arg0: memref<8x32xf32, #tpu.memory_space<vmem>>, %arg1: memref<32x128xf32, #tpu.memory_space<vmem>>, %arg2: memref<1x128xf32, #tpu.memory_space<vmem>>, %arg3: memref<8x128xf32, #tpu.memory_space<vmem>>) attributes {dimension_semantics = [], scalar_prefetch = 0 : i64, scratch_operands = 0 : i64, tpu.core_type = #tpu.core_type<tc>} {
    %c0 = arith.constant 0 : index
    %c0_0 = arith.constant 0 : index
    %0 = vector.load %arg0[%c0, %c0_0] : memref<8x32xf32, #tpu.memory_space<vmem>>, vector<8x32xf32>
    %c0_1 = arith.constant 0 : index
    %c0_2 = arith.constant 0 : index
    %1 = vector.load %arg1[%c0_1, %c0_2] : memref<32x128xf32, #tpu.memory_space<vmem>>, vector<32x128xf32>
    %c0_3 = arith.constant 0 : index
    %c0_4 = arith.constant 0 : index
    %2 = vector.load %arg2[%c0_3, %c0_4] : memref<1x128xf32, #tpu.memory_space<vmem>>, vector<1x128xf32>
    %cst = arith.constant dense<0.000000e+00> : vector<8x128xf32>
    %3 = tpu.matmul %0, %1, %cst {dimension_numbers = #tpu.dot_dimension_numbers<[1], [0], [0], [1], [0, 0, 1, 1], [], []>} : vector<8x32xf32>, vector<32x128xf32>, vector<8x128xf32> -> vector<8x128xf32>
    %4 = vector.broadcast %2 : vector<1x128xf32> to vector<8x128xf32>
    %5 = arith.addf %3, %4 : vector<8x128xf32>
    %6 = tpu.iota {dimensions = array<i32: 1>} : vector<8x128xi32>
    %c16_i32 = arith.constant 16 : i32
    %7 = vector.broadcast %c16_i32 : i32 to vector<8x128xi32>
    %8 = arith.cmpi slt, %6, %7 : vector<8x128xi32>
    %cst_5 = arith.constant -1.000000e+30 : f32
    %9 = vector.broadcast %cst_5 : f32 to vector<8x128xf32>
    %10 = arith.select %8, %5, %9 : vector<8x128xi1>, vector<8x128xf32>
    %cst_6 = arith.constant dense<0xFF800000> : vector<8xf32>
    %11 = vector.multi_reduction <maximumf>, %10, %cst_6 [1] : vector<8x128xf32> to vector<8xf32>
    %12 = vector.shape_cast %11 : vector<8xf32> to vector<8x1xf32>
    %13 = vector.broadcast %12 : vector<8x1xf32> to vector<8x128xf32>
    %14 = arith.subf %10, %13 : vector<8x128xf32>
    %15 = math.exp %14 : vector<8x128xf32>
    %cst_7 = arith.constant dense<0.000000e+00> : vector<8xf32>
    %16 = vector.multi_reduction <add>, %15, %cst_7 [1] : vector<8x128xf32> to vector<8xf32>
    %17 = vector.shape_cast %16 : vector<8xf32> to vector<8x1xf32>
    %18 = math.log %17 : vector<8x1xf32>
    %19 = vector.broadcast %18 : vector<8x1xf32> to vector<8x128xf32>
    %20 = arith.subf %14, %19 : vector<8x128xf32>
    %c0_8 = arith.constant 0 : index
    %c0_9 = arith.constant 0 : index
    %21 = vector.load %arg3[%c0_8, %c0_9] : memref<8x128xf32, #tpu.memory_space<vmem>>, vector<8x128xf32>
    tpu.vector_store %arg3[%c0_8, %c0_9], %20 {strides = array<i32>} : memref<8x128xf32, #tpu.memory_space<vmem>>, vector<8x128xf32>,
    return
  }
}

</mosaic_0001>

<llo_original>
// kernel: model_forward.1
$region0: #{model_forward.1}
  #allocation0 [shape = 'u32[]', space=smem, size = 0x4, offset = 0x4, fixed_abs, tag = 'smem constant byte address 0x4 - core index']
  #allocation1 [shape = 'u32[72,128]{1,0:T(1,128)}', space=vmem, size = 0x9000, scoped, tag = 'internal scratch']
  %s0 = inlined_call_operand.hbm [shape: f32[8,32], index: 0, kind: input, shape index: {}]
  %s1 = inlined_call_operand.hbm [shape: f32[32,128], index: 1, kind: input, shape index: {}]
  %s2 = inlined_call_operand.vmem [shape: f32[1,128], index: 2, kind: input, shape index: {}]
  %s3 = inlined_call_operand.hbm [shape: f32[8,128], index: 3, kind: output, shape index: {}]
  %s4 = sld [smem:[#allocation0]]
  $region30: #{model_forward.1} parent=0
    _
  %s6 = ssub.s32 1, %s4
  %s7 = scalar_select 0, %s6, %s4
  $region1: #{model_forward.1} parent=0
    #allocation2 [shape = 'u8[4096]{0}', space=vmem, size = 0x1000, scoped, tag = 'input window, operand 0, single buffered']
    #allocation3 [shape = 's32[1]{0}', space=sflag, size = 0x4, scoped, tag = 'scoped memory for model_forward.1']
    #allocation4 [shape = 's32[1]{0}', space=sflag, size = 0x4, scoped, tag = 'scoped memory for model_forward.1']
    #allocation5 [shape = 'u8[16384]{0}', space=vmem, size = 0x4000, scoped, tag = 'input window, operand 1, single buffered']
    #allocation6 [shape = 's32[1]{0}', space=sflag, size = 0x4, scoped, tag = 'scoped memory for model_forward.1']
    #allocation7 [shape = 'u8[4096]{0}', space=vmem, size = 0x1000, scoped, tag = 'output window, operand 0, single buffered']
    %8 = vsyncpa [#allocation3], 0
    %9 = vsyncpa [#allocation6], 0
    %10 = vsyncpa [#allocation4], 0
    // Predicated region
    $region2: #{model_forward.1} parent=1 // pred_check
      _
    $region3: #{model_forward.1} parent=1 // pred_check_branch
      %12 = sbr.rel (0) target = $region5
    $region4: #{model_forward.1} parent=1 // pred_region
      %14 = vsyncadd [#allocation3], 0
      %s16 = sshll.u32 %s0, 4
      %s17 = int_to_ptr.hbm [resolvable:$true] %s16
      %s18 = sshll.u32 [#allocation2], 4
      %s19 = int_to_ptr.vmem [resolvable:$true] %s18
      %21 = dma.hbm_to_vmem [thread:$0]  %s17, 128, %s19, [#allocation3]
    $region5: #{model_forward.1} parent=1 // pred_fallthru
      _
    // Predicated region
    $region6: #{model_forward.1} parent=1 // pred_check
      _
    $region7: #{model_forward.1} parent=1 // pred_check_branch
      %23 = sbr.rel (0) target = $region9
    $region8: #{model_forward.1} parent=1 // pred_region
      %25 = vsyncadd [#allocation6], 0
      %s26 = sshll.u32 %s1, 4
      %s27 = int_to_ptr.hbm [resolvable:$true] %s26
      %s28 = sshll.u32 [#allocation5], 4
      %s29 = int_to_ptr.vmem [resolvable:$true] %s28
      %34 = dma.hbm_to_vmem [thread:$0]  %s27, 512, %s29, [#allocation6], 128, 128, 8
    $region9: #{model_forward.1} parent=1 // pred_fallthru
      _
    // Predicated region
    $region10: #{model_forward.1} parent=1 // pred_check
      _
    $region11: #{model_forward.1} parent=1 // pred_check_branch
      %36 = sbr.rel (0) target = $region13
    $region12: #{model_forward.1} parent=1 // pred_region
      _
    $region13: #{model_forward.1} parent=1 // pred_fallthru
      _
    // Predicated region
    $region14: #{model_forward.1} parent=1 // pred_check
      _
    $region15: #{model_forward.1} parent=1 // pred_check_branch
      %38 = sbr.rel (0) target = $region17
    $region16: #{model_forward.1} parent=1 // pred_region
      %40 = dma.done [#allocation3], 128
    $region17: #{model_forward.1} parent=1 // pred_fallthru
      _
    // Predicated region
    $region18: #{model_forward.1} parent=1 // pred_check
      _
    $region19: #{model_forward.1} parent=1 // pred_check_branch
      %42 = sbr.rel (0) target = $region21
    $region20: #{model_forward.1} parent=1 // pred_region
      %44 = dma.done [#allocation6], 512
    $region21: #{model_forward.1} parent=1 // pred_fallthru
      _
    %v45 = vld [vmem:[#allocation2] sm:$0xff]
    %v46 = vld [vmem:[#allocation5] sm:$0xff]
    %v47 = vld [vmem:[#allocation5 + $0x8] sm:$0xff]
    %v48 = vld [vmem:[#allocation5 + $0x10] sm:$0xff]
    %v49 = vld [vmem:[#allocation5 + $0x18] sm:$0xff]
    %v50 = vld [vmem:[%s2] sm:$0x1]
    %v52 = vperm.slane %v50, 0
    %vm54 = vcmask 261120
    %v56 = vsel %vm54, %v45, 0
    %58 = vmatpush.msra.mxu0 0.0
    %59 = vmatpush.msra.mxu0 0.0
    %60 = vmatpush.msra.mxu0 0.0
    %61 = vmatpush.msra.mxu0 0.0
    %62 = vmatpush.msra.mxu0 0.0
    %63 = vmatpush.msra.mxu0 0.0
    %64 = vmatpush.msra.mxu0 0.0
    %65 = vmatpush.msra.mxu0 0.0
    %66 = vmatpush.msra.mxu0 0.0
    %67 = vmatpush.msra.mxu0 0.0
    %68 = vmatpush.msra.mxu0 0.0
    %69 = vmatpush.msra.mxu0 0.0
    %70 = vmatpush.msra.mxu0 %v49
    %71 = vmatpush.msra.mxu0 %v48
    %72 = vmatpush.msra.mxu0 %v47
    %73 = vmatpush.msra.mxu0 %v46
    %74 = vmatmul.f32.gmra.mxu0 %v56
    %v75 = vpop.f32.mrf.mxu0
    %v76 = vadd.f32 %v52, %v75
    %77 = vdwg.mxu0
    %v78 = vlaneseq
    %v79 = vand.u32 %v78, 127
    %vm80 = vcmp.lt.s32.totalorder %v79, 16
    %v81 = vsel %vm80, %v76, -1e+30
    %82 = vmax.xlane.f32.xlu0 %v81
    %v83 = vpop.xlane.xlu0 %82
    %v84 = vsub.f32 %v81, %v83
    %v85 = vmul.f32 %v84, 1.442695
    %v86 = vpow.pop %v85
    %87 = vadd.xlane.f32.xlu0 %v86
    %v88 = vpop.xlane.xlu0 %87
    %v89 = vlog2.pop %v88
    %v90 = vmul.f32 %v89, 0.6931472
    %v91 = vsub.f32 %v84, %v90
    %92 = vst [vmem:[#allocation7] sm:$0xff] %v91
    // Predicated region
    $region22: #{model_forward.1} parent=1 // pred_check
      _
    $region23: #{model_forward.1} parent=1 // pred_check_branch
      %94 = sbr.rel (0) target = $region25
    $region24: #{model_forward.1} parent=1 // pred_region
      %96 = vsyncadd [#allocation4], 0
      %s98 = sshll.u32 [#allocation7], 4
      %s99 = int_to_ptr.vmem [resolvable:$true] %s98
      %s100 = sshll.u32 %s3, 4
      %s101 = int_to_ptr.hbm [resolvable:$true] %s100
      %103 = dma.vmem_to_hbm [thread:$0]  %s99, 128, %s101, [#allocation4]
    $region25: #{model_forward.1} parent=1 // pred_fallthru
      _
    // Predicated region
    $region26: #{model_forward.1} parent=1 // pred_check
      _
    $region27: #{model_forward.1} parent=1 // pred_check_branch
      %105 = sbr.rel (0) target = $region29
    $region28: #{model_forward.1} parent=1 // pred_region
      %107 = dma.done [#allocation4], 128
    $region29: #{model_forward.1} parent=1 // pred_fallthru
      _
    %108 = vsyncpa [#allocation3], 1
    %109 = vsyncpa [#allocation6], 1
    %110 = vsyncpa [#allocation4], 1

</llo_original>
